<compile_context>
chip_gen: v6e
topology: v6e:2x2x1
jax: 0.10.0
libtpu: 0.0.40
codegen_flags: <defaults>
</compile_context>

<pallas_src>
import jax
import jax.numpy as jnp
from jax.experimental import pallas as pl
from jax.experimental.pallas import tpu as pltpu


def _onehot_kernel(labels_ref, out_ref):
    # labels_ref: (tile, 1) int32    out_ref: (tile, d_pad) out dtype
    tile, d_pad = out_ref.shape
    lab = labels_ref[...]                                          # (tile, 1) int32
    iota = jax.lax.broadcasted_iota(jnp.int32, (tile, d_pad), 1)   # (tile, d_pad)
    # Compare in int32; cast only at the store. Out-of-range / padded labels
    # (e.g. -1) produce all-zero rows, which exist only in the padded region
    # and are sliced off by the wrapper.
    out_ref[...] = (iota == lab).astype(out_ref.dtype)


def _round_up(x, m):
    return ((x + m - 1) // m) * m


def one_hot_encode(labels, dim, *, dtype=jnp.float32, max_tile_rows=1024):
    """One-hot encode integer `labels` into labels.shape + (dim,) of `dtype`.

    Equivalent to torch: eye(dim)[labels]. Rows (flattened labels) are tiled
    in chunks of up to `max_tile_rows` (multiple of 8); columns are padded to
    a multiple of 128 inside the kernel for lane-dense stores and sliced back
    afterwards.
    """
    orig_shape = labels.shape
    flat = labels.astype(jnp.int32).reshape(-1)
    n = flat.shape[0]

    # Lane-dense padded column count (output last dim multiple of 128).
    d_pad = max(128, _round_up(dim, 128))
    itemsize = jnp.dtype(dtype).itemsize

    # Row tile: multiple of 8, bounded by max_tile_rows, by the (padded) row
    # count, and by a VMEM budget for the double-buffered output tile.
    vmem_budget = 8 * 1024 * 1024  # per output buffer (x2 for double buffering)
    rows_by_vmem = max(8, (vmem_budget // (d_pad * itemsize)) // 8 * 8)
    tile = min(_round_up(max_tile_rows, 8), _round_up(n, 8), rows_by_vmem)
    n_pad = _round_up(n, tile)

    labels2d = flat.reshape(n, 1)
    if n_pad != n:
        # Padded rows get label -1 -> all-zero rows; sliced off below.
        labels2d = jnp.pad(
            labels2d, ((0, n_pad - n), (0, 0)), constant_values=-1
        )

    grid = (n_pad // tile,)
    out = pl.pallas_call(
        _onehot_kernel,
        out_shape=jax.ShapeDtypeStruct((n_pad, d_pad), dtype),
        grid=grid,
        in_specs=[
            pl.BlockSpec((tile, 1), lambda i: (i, 0)),       # labels tile
        ],
        out_specs=pl.BlockSpec((tile, d_pad), lambda i: (i, 0)),
        compiler_params=pltpu.CompilerParams(
            dimension_semantics=("parallel",),               # shard rows across TCs
        ),
    )(labels2d)

    # Slice away row padding and lane padding, restore original label shape.
    return out[:n, :dim].reshape(orig_shape + (dim,))


if __name__ == "__main__":
    key = jax.random.PRNGKey(0)

    dim = 8     # number of classes (OneHotEncoder(dim=8))
    n = 16      # number of labels in the batch

    # Deterministic integer labels in [0, dim).
    labels = jax.random.randint(key, (n,), 0, dim, dtype=jnp.int32)

    out = one_hot_encode(labels, dim, dtype=jnp.float32)
    out = jax.block_until_ready(out)

    # Reference: frozen identity gather, eye[labels].
    eye = jnp.eye(dim, dtype=jnp.float32)
    ref = eye[labels]

    assert out.shape == (n, dim)
    assert out.dtype == jnp.float32
    assert jnp.allclose(out, ref), "Pallas one-hot does not match eye[labels]"

    # Also check a non-1D label tensor (eye[labels] broadcasts over shape).
    labels2 = labels.reshape(2, 8)
    out2 = jax.block_until_ready(one_hot_encode(labels2, dim, dtype=jnp.float32))
    assert out2.shape == (2, 8, dim)
    assert jnp.allclose(out2, eye[labels2]), "Pallas one-hot (2D labels) mismatch"

    print("KERNEL_OK")
</pallas_src>

<mosaic_0001>
module attributes {stable_mosaic.version = 11 : i64} {
  func.func @_onehot_kernel(%arg0: i32, %arg1: memref<16x1xi32, #tpu.memory_space<vmem>>, %arg2: memref<16x128xf32, #tpu.memory_space<vmem>>) attributes {dimension_semantics = [#tpu.dimension_semantics<parallel>], iteration_bounds = array<i64: 1>, scalar_prefetch = 0 : i64, scratch_operands = 0 : i64, tpu.core_type = #tpu.core_type<tc>, window_params = [{transform_indices = @transform_0, window_bounds = array<i64: 16, 1>}, {transform_indices = @transform_1, window_bounds = array<i64: 16, 128>}]} {
    %c0 = arith.constant 0 : index
    %c0_0 = arith.constant 0 : index
    %0 = vector.load %arg1[%c0, %c0_0] : memref<16x1xi32, #tpu.memory_space<vmem>>, vector<16x1xi32>
    %1 = tpu.iota {dimensions = array<i32: 1>} : vector<16x128xi32>
    %2 = vector.broadcast %0 : vector<16x1xi32> to vector<16x128xi32>
    %3 = arith.cmpi eq, %1, %2 : vector<16x128xi32>
    %4 = arith.extui %3 : vector<16x128xi1> to vector<16x128xi32>
    %5 = arith.sitofp %4 : vector<16x128xi32> to vector<16x128xf32>
    %c0_1 = arith.constant 0 : index
    %c0_2 = arith.constant 0 : index
    %6 = vector.load %arg2[%c0_1, %c0_2] : memref<16x128xf32, #tpu.memory_space<vmem>>, vector<16x128xf32>
    tpu.vector_store %arg2[%c0_1, %c0_2], %5 {strides = array<i32>} : memref<16x128xf32, #tpu.memory_space<vmem>>, vector<16x128xf32>,
    return
  }
  func.func @transform_0(%arg0: i32) -> (i32, i32) {
    %c0_i32 = arith.constant 0 : i32
    %c0_i32_0 = arith.constant 0 : i32
    return %arg0, %c0_i32 : i32, i32
  }
  func.func @transform_1(%arg0: i32) -> (i32, i32) {
    %c0_i32 = arith.constant 0 : i32
    %c0_i32_0 = arith.constant 0 : i32
    return %arg0, %c0_i32 : i32, i32
  }
}

</mosaic_0001>

<llo_original>
// kernel: tpu_custom_call.1
$region0: #{tpu_custom_call.1}
  #allocation0 [shape = 'u32[]', space=smem, size = 0x4, offset = 0x4, fixed_abs, tag = 'smem constant byte address 0x4 - core index']
  #allocation1 [shape = 'u32[144,128]{1,0:T(1,128)}', space=vmem, size = 0x12000, scoped, tag = 'internal scratch']
  %s0 = inlined_call_operand.vmem [shape: s32[16,1], index: 0, kind: input, shape index: {}]
  %s1 = inlined_call_operand.hbm [shape: f32[16,128], index: 1, kind: output, shape index: {}]
  %s2 = sld [smem:[#allocation0]]
  $region14: #{tpu_custom_call.1} parent=0
    _
  %s4 = ssub.s32 1, %s2
  %s5 = scalar_select 0, %s4, %s2
  $region1: #{tpu_custom_call.1} parent=0
    #allocation2 [shape = 'u8[8192]{0}', space=vmem, size = 0x2000, scoped, tag = 'output window, operand 0, single buffered']
    #allocation3 [shape = 's32[1]{0}', space=sflag, size = 0x4, scoped, tag = 'scoped memory for tpu_custom_call.1']
    %6 = vsyncpa [#allocation3], 0
    // Predicated region
    $region2: #{tpu_custom_call.1} parent=1 // pred_check
      _
    $region3: #{tpu_custom_call.1} parent=1 // pred_check_branch
      %8 = sbr.rel (0) target = $region5
    $region4: #{tpu_custom_call.1} parent=1 // pred_region
      _
    $region5: #{tpu_custom_call.1} parent=1 // pred_fallthru
      _
    %v9 = vld [vmem:[%s0] sm:$0xff]
    %v10 = vld [vmem:[%s0 + $0x8] sm:$0xff]
    %v11 = vlaneseq
    %v12 = vand.u32 %v11, 127
    %13 = vset.pattern.permute.xlu0 0
    %14 = vperm.xlu0 %13, %v9
    %v15 = vpop.permute.xlu0 %14
    %16 = vset.pattern.permute.xlu0 0
    %17 = vperm.xlu0 %16, %v10
    %v18 = vpop.permute.xlu0 %17
    %vm19 = vcmp.eq.s32.totalorder %v12, %v15
    %vm20 = vcmp.eq.s32.totalorder %v12, %v18
    %v21 = vsel %vm19, 1, 0
    %v22 = vsel %vm20, 1, 0
    %v23 = vcvt.s32.f32 %v21
    %v24 = vcvt.s32.f32 %v22
    %25 = vst [vmem:[#allocation2] sm:$0xff] %v23
    %26 = vst [vmem:[#allocation2 + $0x8] sm:$0xff] %v24
    // Predicated region
    $region6: #{tpu_custom_call.1} parent=1 // pred_check
      _
    $region7: #{tpu_custom_call.1} parent=1 // pred_check_branch
      %28 = sbr.rel (0) target = $region9
    $region8: #{tpu_custom_call.1} parent=1 // pred_region
      %s30 = ssub.s32 256, 256
      %31 = vsyncadd [#allocation3], %s30
      %s32 = sshll.u32 [#allocation2], 4
      %s33 = int_to_ptr.vmem [resolvable:$true] %s32
      %38 = dma.vmem_to_hbm [thread:$0]  %s33, 256, %s1, [#allocation3], 128, 128, 8
    $region9: #{tpu_custom_call.1} parent=1 // pred_fallthru
      _
    // Predicated region
    $region10: #{tpu_custom_call.1} parent=1 // pred_check
      _
    $region11: #{tpu_custom_call.1} parent=1 // pred_check_branch
      %40 = sbr.rel (0) target = $region13
    $region12: #{tpu_custom_call.1} parent=1 // pred_region
      %41 = dma.done [#allocation3], 256
    $region13: #{tpu_custom_call.1} parent=1 // pred_fallthru
      _
    %42 = vsyncpa [#allocation3], 1

</llo_original>
